<compile_context>
chip_gen: v7x
topology: tpu7x:2x2x1
jax: 0.10.0
libtpu: 0.0.40
codegen_flags: <defaults>
</compile_context>

<pallas_src>
import jax
import jax.numpy as jnp
from jax.experimental import pallas as pl
from jax.experimental.pallas import tpu as pltpu

EPS = 1e-5

# v6e/v7x: bf16 VPU/EUP runs ~2x f32 on the dominant (P, F) SiLU intermediate.
# Set False on v5e (no bf16 element-wise path) -- correctness is unaffected.
_SILU_IN_BF16 = True

_VMEM_BUDGET = 40 * 1024 * 1024  # headroom under v7x's 64 MiB physical VMEM


def _round_up(n, m):
    return ((n + m - 1) // m) * m


def encoder_kernel(
    x_ref,            # (TB, C, P)  bf16  lane-dense spatial layout, one batch tile
    wh_ref,           # (C, Fp)     bf16  head 1x1 conv weight, BN folded, F padded
    bh_ref,           # (1, Fp)     f32   head bias, BN folded
    w1_ref,           # (Fp, Hp)    bf16  neck Linear1 weight, BN1d + 1/P folded
    b1_ref,           # (1, Hp)     f32   neck Linear1 bias, BN1d folded
    w2_ref,           # (Hp, Op)    bf16  neck Linear2 weight, zero padded
    b2_ref,           # (1, Op)     f32   neck Linear2 bias, zero padded
    out_ref,          # (TB, Op)    f32
    feat_ref,         # (TB, Fp)    f32   pooled backbone features (scratch)
):
    TB, _, P = x_ref.shape
    act_dt = jnp.bfloat16 if _SILU_IN_BF16 else jnp.float32
    ones_row = jnp.ones((1, P), jnp.bfloat16)   # pooling weights; 1/P folded in w1

    # --- Backbone head stand-in: folded (1x1 conv + BN) -> SiLU -> avg pool. --
    # TODO(synk): full frozen EfficientNet-B4 MBConv stack not reproduced; only
    #             the final head stage feeding the neck is implemented.  With
    #             the real channel count (~448) this dot fills the MXU depth;
    #             with the toy C=4 the MXU is under-filled but otherwise idle.
    for b in range(TB):                                      # static unroll, TB <= 8
        xb = x_ref[b]                                        # (C, P) bf16
        h = jax.lax.dot_general(                             # (P, Fp) f32
            xb, wh_ref[...],
            dimension_numbers=(((0,), (0,)), ((), ())),
            preferred_element_type=jnp.float32)
        h = (h + bh_ref[...]).astype(act_dt)
        h = (h * jax.nn.sigmoid(h)).astype(jnp.bfloat16)     # SiLU
        # Global average pool over P on the MXU (1/P folded into w1).
        feat_ref[b:b + 1, :] = jnp.dot(
            ones_row, h, preferred_element_type=jnp.float32)  # (1, Fp)

    # --- Neck: Linear -> folded BN1d -> SiLU -> Dropout(eval=id) -> Linear. ---
    feat = feat_ref[...].astype(jnp.bfloat16)                # (TB, Fp)
    z = jnp.dot(feat, w1_ref[...],
                preferred_element_type=jnp.float32) + b1_ref[...]
    z = z.astype(act_dt)
    z = (z * jax.nn.sigmoid(z)).astype(jnp.bfloat16)         # SiLU; Dropout = identity
    out = jnp.dot(z, w2_ref[...],
                  preferred_element_type=jnp.float32) + b2_ref[...]
    out_ref[...] = out.astype(out_ref.dtype)


def _pad2d(x, rows=None, cols=None):
    r = x.shape[0] if rows is None else rows
    c = x.shape[1] if cols is None else cols
    return jnp.zeros((r, c), x.dtype).at[:x.shape[0], :x.shape[1]].set(x)


def _fold_params(params, P, eps=EPS):
    """Fold eval BatchNorms, pooling 1/P, and lane padding into the weights."""
    f32, bf16 = jnp.float32, jnp.bfloat16

    C, F = params["wh"].shape
    Hn = params["w1"].shape[1]
    O = params["w2"].shape[1]
    Fp, Hp, Op = _round_up(F, 128), _round_up(Hn, 128), _round_up(O, 128)

    # Backbone head: conv -> BN  ==>  conv with folded scale/bias (zero-pad F).
    sh = params["hg"] * jax.lax.rsqrt(params["hv"] + eps)                 # (1, F)
    wh_f = _pad2d((params["wh"] * sh).astype(f32), cols=Fp).astype(bf16)  # (C, Fp)
    bh_f = _pad2d(((params["bh"] - params["hm"]) * sh
                   + params["hb"]).astype(f32), cols=Fp)                  # (1, Fp)

    # Neck Linear1 -> BN1d; fold the 1/P of the global average pool; pad F, Hn.
    s1 = params["g"] * jax.lax.rsqrt(params["rv"] + eps)                  # (1, Hn)
    w1_f = _pad2d((params["w1"] * s1 / P).astype(f32),
                  rows=Fp, cols=Hp).astype(bf16)                          # (Fp, Hp)
    b1_f = _pad2d(((params["b1"] - params["rm"]) * s1
                   + params["be"]).astype(f32), cols=Hp)                  # (1, Hp)

    # Neck Linear2, zero-padded to lane-dense output.
    w2_p = _pad2d(params["w2"].astype(f32), rows=Hp, cols=Op).astype(bf16)
    b2_p = _pad2d(params["b2"].astype(f32), cols=Op)
    return wh_f, bh_f, w1_f, b1_f, w2_p, b2_p, O, Op


def _vmem_bytes(TB, C, P, Fp, Hp, Op):
    """Rough per-step VMEM footprint (double-buffered blocks + intermediates)."""
    bf, f4 = 2, 4
    blocks = 2 * (TB * C * P * bf
                  + C * Fp * bf + Fp * f4
                  + Fp * Hp * bf + Hp * f4
                  + Hp * Op * bf + Op * f4
                  + TB * Op * f4)
    interm = TB * P * Fp * (f4 + bf) + TB * Fp * f4
    return blocks + interm


def encoder_forward(x_nchw, params):
    """x_nchw: (B, C, H, W) float32.  Returns (B, neck_out_features) float32."""
    B, C, H, W = x_nchw.shape
    P = H * W
    wh_f, bh_f, w1_f, b1_f, w2_p, b2_p, O, Op = _fold_params(params, P)
    Fp, Hp = wh_f.shape[1], w1_f.shape[1]

    # Batch tile: whole (small) batch per grid step; shrink only if VMEM-bound.
    TB = min(B, 8)
    while TB > 1 and _vmem_bytes(TB, C, P, Fp, Hp, Op) > _VMEM_BUDGET:
        TB //= 2
    B_pad = _round_up(B, TB)

    # Lane-dense input layout: spatial axis on lanes, channels on sublanes.
    x = x_nchw.reshape(B, C, P).astype(jnp.bfloat16)
    if B_pad != B:
        x = jnp.zeros((B_pad, C, P), jnp.bfloat16).at[:B].set(x)

    vmem_limit = int(min(56 * 1024 * 1024,
                         max(4 * _vmem_bytes(TB, C, P, Fp, Hp, Op),
                             16 * 1024 * 1024)))

    out = pl.pallas_call(
        encoder_kernel,
        grid=(B_pad // TB,),
        in_specs=[
            pl.BlockSpec((TB, C, P), lambda b: (b, 0, 0)),
            pl.BlockSpec(wh_f.shape, lambda b: (0, 0)),
            pl.BlockSpec(bh_f.shape, lambda b: (0, 0)),
            pl.BlockSpec(w1_f.shape, lambda b: (0, 0)),
            pl.BlockSpec(b1_f.shape, lambda b: (0, 0)),
            pl.BlockSpec(w2_p.shape, lambda b: (0, 0)),
            pl.BlockSpec(b2_p.shape, lambda b: (0, 0)),
        ],
        out_specs=pl.BlockSpec((TB, Op), lambda b: (b, 0)),
        out_shape=jax.ShapeDtypeStruct((B_pad, Op), jnp.float32),
        scratch_shapes=[pltpu.VMEM((TB, Fp), jnp.float32)],
        compiler_params=pltpu.CompilerParams(
            # TODO(synk): on v7x use CORE_PARALLEL here (2 TCs) once the batch-
            #             tile count is >= 2; plain "parallel" is a no-op there.
            dimension_semantics=("parallel",),
            vmem_limit_bytes=vmem_limit,
        ),
    )(x, wh_f, bh_f, w1_f, b1_f, w2_p, b2_p)

    return out[:B, :O]


def encoder_reference(x_nchw, params):
    """Pure-JAX reference mirroring the kernel's folded math and dtype flow."""
    B, C, H, W = x_nchw.shape
    P = H * W
    wh_f, bh_f, w1_f, b1_f, w2_p, b2_p, O, _ = _fold_params(params, P)
    f32 = jnp.float32
    act_dt = jnp.bfloat16 if _SILU_IN_BF16 else jnp.float32

    x = x_nchw.reshape(B, C, P).astype(jnp.bfloat16).astype(f32)
    h = jnp.einsum("bcp,cf->bpf", x, wh_f.astype(f32)) + bh_f
    h = h.astype(act_dt)
    h = (h * jax.nn.sigmoid(h)).astype(jnp.bfloat16)
    feat = jnp.sum(h.astype(f32), axis=1)            # 1/P folded into w1_f
    feat = feat.astype(jnp.bfloat16).astype(f32)
    z = feat @ w1_f.astype(f32) + b1_f
    z = z.astype(act_dt)
    z = (z * jax.nn.sigmoid(z)).astype(jnp.bfloat16).astype(f32)
    out = z @ w2_p.astype(f32) + b2_p
    return out[:, :O]


def init_params(key, C, clsf_in, neck_hidden, neck_out):
    ks = jax.random.split(key, 8)
    f32 = jnp.float32
    return {
        # backbone 1x1 conv head + its BN (frozen, eval stats)
        "wh": jax.random.normal(ks[0], (C, clsf_in), f32) * 0.05,
        "bh": jax.random.normal(ks[1], (1, clsf_in), f32) * 0.01,
        "hg": jnp.ones((1, clsf_in), f32),
        "hb": jnp.zeros((1, clsf_in), f32),
        "hm": jax.random.normal(ks[2], (1, clsf_in), f32) * 0.01,
        "hv": jnp.full((1, clsf_in), 1.0, f32),
        # neck Linear1 (stored as (in, out) == PyTorch weight.T)
        "w1": jax.random.normal(ks[3], (clsf_in, neck_hidden), f32) * 0.05,
        "b1": jax.random.normal(ks[4], (1, neck_hidden), f32) * 0.01,
        # neck BatchNorm1d (eval running stats)
        "g":  jnp.ones((1, neck_hidden), f32),
        "be": jnp.zeros((1, neck_hidden), f32),
        "rm": jax.random.normal(ks[5], (1, neck_hidden), f32) * 0.01,
        "rv": jnp.full((1, neck_hidden), 1.0, f32),
        # neck Linear2
        "w2": jax.random.normal(ks[6], (neck_hidden, neck_out), f32) * 0.05,
        "b2": jax.random.normal(ks[7], (1, neck_out), f32) * 0.01,
    }


if __name__ == "__main__":
    # Small shapes consistent with the module's forward:
    #   x: (B=2, C=4, H=16, W=16); clsf_in_features=64 (scaled-down 1792),
    #   neck_hidden_features=32 (scaled-down 512), neck_out_features=53.
    B, C, H, W = 2, 4, 16, 16
    CLSF_IN, NECK_HIDDEN, NECK_OUT = 64, 32, 53

    key = jax.random.PRNGKey(0)
    kx, kp = jax.random.split(key)
    x = jax.random.normal(kx, (B, C, H, W), jnp.float32)
    params = init_params(kp, C, CLSF_IN, NECK_HIDDEN, NECK_OUT)

    out = jax.block_until_ready(encoder_forward(x, params))
    assert out.shape == (B, NECK_OUT) and out.dtype == jnp.float32
    assert bool(jnp.all(jnp.isfinite(out)))

    ref = encoder_reference(x, params)
    assert bool(jnp.allclose(out, ref, rtol=1e-2, atol=5e-4)), float(
        jnp.max(jnp.abs(out - ref)))
    print("KERNEL_OK")
</pallas_src>

<mosaic_0001>
module attributes {stable_mosaic.version = 11 : i64} {
  func.func @encoder_kernel(%arg0: i32, %arg1: memref<2x4x256xbf16, #tpu.memory_space<vmem>>, %arg2: memref<4x128xbf16, #tpu.memory_space<vmem>>, %arg3: memref<1x128xf32, #tpu.memory_space<vmem>>, %arg4: memref<128x128xbf16, #tpu.memory_space<vmem>>, %arg5: memref<1x128xf32, #tpu.memory_space<vmem>>, %arg6: memref<128x128xbf16, #tpu.memory_space<vmem>>, %arg7: memref<1x128xf32, #tpu.memory_space<vmem>>, %arg8: memref<2x128xf32, #tpu.memory_space<vmem>>, %arg9: memref<2x128xf32, #tpu.memory_space<vmem>>) attributes {dimension_semantics = [#tpu.dimension_semantics<parallel>], iteration_bounds = array<i64: 1>, scalar_prefetch = 0 : i64, scratch_operands = 1 : i64, tpu.core_type = #tpu.core_type<tc>, window_params = [{transform_indices = @transform_0, window_bounds = array<i64: 2, 4, 256>}, {pipeline_mode = #tpu.pipeline_mode<synchronous>, transform_indices = @transform_1, window_bounds = array<i64: 4, 128>}, {pipeline_mode = #tpu.pipeline_mode<synchronous>, transform_indices = @transform_2, window_bounds = array<i64: 1, 128>}, {pipeline_mode = #tpu.pipeline_mode<synchronous>, transform_indices = @transform_3, window_bounds = array<i64: 128, 128>}, {pipeline_mode = #tpu.pipeline_mode<synchronous>, transform_indices = @transform_4, window_bounds = array<i64: 1, 128>}, {pipeline_mode = #tpu.pipeline_mode<synchronous>, transform_indices = @transform_5, window_bounds = array<i64: 128, 128>}, {pipeline_mode = #tpu.pipeline_mode<synchronous>, transform_indices = @transform_6, window_bounds = array<i64: 1, 128>}, {transform_indices = @transform_7, window_bounds = array<i64: 2, 128>}]} {
    %cst = arith.constant 1.000000e+00 : bf16
    %0 = vector.broadcast %cst : bf16 to vector<1x256xbf16>
    %c0 = arith.constant 0 : index
    %c0_0 = arith.constant 0 : index
    %c0_1 = arith.constant 0 : index
    %1 = vector.load %arg1[%c0, %c0_0, %c0_1] : memref<2x4x256xbf16, #tpu.memory_space<vmem>>, vector<1x4x256xbf16>
    %2 = vector.shape_cast %1 : vector<1x4x256xbf16> to vector<4x256xbf16>
    %c0_2 = arith.constant 0 : index
    %c0_3 = arith.constant 0 : index
    %3 = vector.load %arg2[%c0_2, %c0_3] : memref<4x128xbf16, #tpu.memory_space<vmem>>, vector<4x128xbf16>
    %cst_4 = arith.constant dense<0.000000e+00> : vector<256x128xf32>
    %4 = tpu.matmul %2, %3, %cst_4 {dimension_numbers = #tpu.dot_dimension_numbers<[0], [0], [1], [1], [0, 1, 1, 1], [], []>} : vector<4x256xbf16>, vector<4x128xbf16>, vector<256x128xf32> -> vector<256x128xf32>
    %c0_5 = arith.constant 0 : index
    %c0_6 = arith.constant 0 : index
    %5 = vector.load %arg3[%c0_5, %c0_6] : memref<1x128xf32, #tpu.memory_space<vmem>>, vector<1x128xf32>
    %6 = vector.broadcast %5 : vector<1x128xf32> to vector<256x128xf32>
    %7 = arith.addf %4, %6 : vector<256x128xf32>
    %8 = arith.truncf %7 : vector<256x128xf32> to vector<256x128xbf16>
    %9 = arith.negf %8 : vector<256x128xbf16>
    %10 = math.exp %9 : vector<256x128xbf16>
    %cst_7 = arith.constant 1.000000e+00 : bf16
    %11 = vector.broadcast %cst_7 : bf16 to vector<256x128xbf16>
    %12 = arith.addf %11, %10 : vector<256x128xbf16>
    %13 = arith.divf %11, %12 : vector<256x128xbf16>
    %14 = arith.mulf %8, %13 : vector<256x128xbf16>
    %cst_8 = arith.constant dense<0.000000e+00> : vector<1x128xf32>
    %15 = tpu.matmul %0, %14, %cst_8 {dimension_numbers = #tpu.dot_dimension_numbers<[1], [0], [0], [1], [0, 0, 1, 1], [], []>} : vector<1x256xbf16>, vector<256x128xbf16>, vector<1x128xf32> -> vector<1x128xf32>
    %c0_9 = arith.constant 0 : index
    %c0_10 = arith.constant 0 : index
    %16 = vector.load %arg9[%c0_9, %c0_10] : memref<2x128xf32, #tpu.memory_space<vmem>>, vector<1x128xf32>
    tpu.vector_store %arg9[%c0_9, %c0_10], %15 {strides = array<i32>} : memref<2x128xf32, #tpu.memory_space<vmem>>, vector<1x128xf32>,
    %c1 = arith.constant 1 : index
    %c0_11 = arith.constant 0 : index
    %c0_12 = arith.constant 0 : index
    %17 = vector.load %arg1[%c1, %c0_11, %c0_12] : memref<2x4x256xbf16, #tpu.memory_space<vmem>>, vector<1x4x256xbf16>
    %18 = vector.shape_cast %17 : vector<1x4x256xbf16> to vector<4x256xbf16>
    %c0_13 = arith.constant 0 : index
    %c0_14 = arith.constant 0 : index
    %19 = vector.load %arg2[%c0_13, %c0_14] : memref<4x128xbf16, #tpu.memory_space<vmem>>, vector<4x128xbf16>
    %cst_15 = arith.constant dense<0.000000e+00> : vector<256x128xf32>
    %20 = tpu.matmul %18, %19, %cst_15 {dimension_numbers = #tpu.dot_dimension_numbers<[0], [0], [1], [1], [0, 1, 1, 1], [], []>} : vector<4x256xbf16>, vector<4x128xbf16>, vector<256x128xf32> -> vector<256x128xf32>
    %c0_16 = arith.constant 0 : index
    %c0_17 = arith.constant 0 : index
    %21 = vector.load %arg3[%c0_16, %c0_17] : memref<1x128xf32, #tpu.memory_space<vmem>>, vector<1x128xf32>
    %22 = vector.broadcast %21 : vector<1x128xf32> to vector<256x128xf32>
    %23 = arith.addf %20, %22 : vector<256x128xf32>
    %24 = arith.truncf %23 : vector<256x128xf32> to vector<256x128xbf16>
    %25 = arith.negf %24 : vector<256x128xbf16>
    %26 = math.exp %25 : vector<256x128xbf16>
    %cst_18 = arith.constant 1.000000e+00 : bf16
    %27 = vector.broadcast %cst_18 : bf16 to vector<256x128xbf16>
    %28 = arith.addf %27, %26 : vector<256x128xbf16>
    %29 = arith.divf %27, %28 : vector<256x128xbf16>
    %30 = arith.mulf %24, %29 : vector<256x128xbf16>
    %cst_19 = arith.constant dense<0.000000e+00> : vector<1x128xf32>
    %31 = tpu.matmul %0, %30, %cst_19 {dimension_numbers = #tpu.dot_dimension_numbers<[1], [0], [0], [1], [0, 0, 1, 1], [], []>} : vector<1x256xbf16>, vector<256x128xbf16>, vector<1x128xf32> -> vector<1x128xf32>
    %c1_20 = arith.constant 1 : index
    %c0_21 = arith.constant 0 : index
    %32 = vector.load %arg9[%c1_20, %c0_21] : memref<2x128xf32, #tpu.memory_space<vmem>>, vector<1x128xf32>
    tpu.vector_store %arg9[%c1_20, %c0_21], %31 {strides = array<i32>} : memref<2x128xf32, #tpu.memory_space<vmem>>, vector<1x128xf32>,
    %c0_22 = arith.constant 0 : index
    %c0_23 = arith.constant 0 : index
    %33 = vector.load %arg9[%c0_22, %c0_23] : memref<2x128xf32, #tpu.memory_space<vmem>>, vector<2x128xf32>
    %34 = arith.truncf %33 : vector<2x128xf32> to vector<2x128xbf16>
    %c0_24 = arith.constant 0 : index
    %c0_25 = arith.constant 0 : index
    %35 = vector.load %arg4[%c0_24, %c0_25] : memref<128x128xbf16, #tpu.memory_space<vmem>>, vector<128x128xbf16>
    %cst_26 = arith.constant dense<0.000000e+00> : vector<2x128xf32>
    %36 = tpu.matmul %34, %35, %cst_26 {dimension_numbers = #tpu.dot_dimension_numbers<[1], [0], [0], [1], [0, 0, 1, 1], [], []>} : vector<2x128xbf16>, vector<128x128xbf16>, vector<2x128xf32> -> vector<2x128xf32>
    %c0_27 = arith.constant 0 : index
    %c0_28 = arith.constant 0 : index
    %37 = vector.load %arg5[%c0_27, %c0_28] : memref<1x128xf32, #tpu.memory_space<vmem>>, vector<1x128xf32>
    %38 = vector.broadcast %37 : vector<1x128xf32> to vector<2x128xf32>
    %39 = arith.addf %36, %38 : vector<2x128xf32>
    %40 = arith.truncf %39 : vector<2x128xf32> to vector<2x128xbf16>
    %41 = arith.negf %40 : vector<2x128xbf16>
    %42 = math.exp %41 : vector<2x128xbf16>
    %cst_29 = arith.constant 1.000000e+00 : bf16
    %43 = vector.broadcast %cst_29 : bf16 to vector<2x128xbf16>
    %44 = arith.addf %43, %42 : vector<2x128xbf16>
    %45 = arith.divf %43, %44 : vector<2x128xbf16>
    %46 = arith.mulf %40, %45 : vector<2x128xbf16>
    %c0_30 = arith.constant 0 : index
    %c0_31 = arith.constant 0 : index
    %47 = vector.load %arg6[%c0_30, %c0_31] : memref<128x128xbf16, #tpu.memory_space<vmem>>, vector<128x128xbf16>
    %cst_32 = arith.constant dense<0.000000e+00> : vector<2x128xf32>
    %48 = tpu.matmul %46, %47, %cst_32 {dimension_numbers = #tpu.dot_dimension_numbers<[1], [0], [0], [1], [0, 0, 1, 1], [], []>} : vector<2x128xbf16>, vector<128x128xbf16>, vector<2x128xf32> -> vector<2x128xf32>
    %c0_33 = arith.constant 0 : index
    %c0_34 = arith.constant 0 : index
    %49 = vector.load %arg7[%c0_33, %c0_34] : memref<1x128xf32, #tpu.memory_space<vmem>>, vector<1x128xf32>
    %50 = vector.broadcast %49 : vector<1x128xf32> to vector<2x128xf32>
    %51 = arith.addf %48, %50 : vector<2x128xf32>
    %c0_35 = arith.constant 0 : index
    %c0_36 = arith.constant 0 : index
    %52 = vector.load %arg8[%c0_35, %c0_36] : memref<2x128xf32, #tpu.memory_space<vmem>>, vector<2x128xf32>
    tpu.vector_store %arg8[%c0_35, %c0_36], %51 {strides = array<i32>} : memref<2x128xf32, #tpu.memory_space<vmem>>, vector<2x128xf32>,
    return
  }
  func.func @transform_0(%arg0: i32) -> (i32, i32, i32) {
    %c0_i32 = arith.constant 0 : i32
    %c0_i32_0 = arith.constant 0 : i32
    %c0_i32_1 = arith.constant 0 : i32
    return %arg0, %c0_i32, %c0_i32_0 : i32, i32, i32
  }
  func.func @transform_1(%arg0: i32) -> (i32, i32) {
    %c0_i32 = arith.constant 0 : i32
    %c0_i32_0 = arith.constant 0 : i32
    %c0_i32_1 = arith.constant 0 : i32
    return %c0_i32, %c0_i32_0 : i32, i32
  }
  func.func @transform_2(%arg0: i32) -> (i32, i32) {
    %c0_i32 = arith.constant 0 : i32
    %c0_i32_0 = arith.constant 0 : i32
    %c0_i32_1 = arith.constant 0 : i32
    return %c0_i32, %c0_i32_0 : i32, i32
  }
  func.func @transform_3(%arg0: i32) -> (i32, i32) {
    %c0_i32 = arith.constant 0 : i32
    %c0_i32_0 = arith.constant 0 : i32
    %c0_i32_1 = arith.constant 0 : i32
    return %c0_i32, %c0_i32_0 : i32, i32
  }
  func.func @transform_4(%arg0: i32) -> (i32, i32) {
    %c0_i32 = arith.constant 0 : i32
    %c0_i32_0 = arith.constant 0 : i32
    %c0_i32_1 = arith.constant 0 : i32
    return %c0_i32, %c0_i32_0 : i32, i32
  }
  func.func @transform_5(%arg0: i32) -> (i32, i32) {
    %c0_i32 = arith.constant 0 : i32
    %c0_i32_0 = arith.constant 0 : i32
    %c0_i32_1 = arith.constant 0 : i32
    return %c0_i32, %c0_i32_0 : i32, i32
  }
  func.func @transform_6(%arg0: i32) -> (i32, i32) {
    %c0_i32 = arith.constant 0 : i32
    %c0_i32_0 = arith.constant 0 : i32
    %c0_i32_1 = arith.constant 0 : i32
    return %c0_i32, %c0_i32_0 : i32, i32
  }
  func.func @transform_7(%arg0: i32) -> (i32, i32) {
    %c0_i32 = arith.constant 0 : i32
    %c0_i32_0 = arith.constant 0 : i32
    return %arg0, %c0_i32 : i32, i32
  }
}

</mosaic_0001>

<llo_original>
// kernel: tpu_custom_call.1
$region0: #{tpu_custom_call.1}
  #allocation0 [shape = 'u32[]', space=smem, size = 0x4, offset = 0x4, fixed_abs, tag = 'smem constant byte address 0x4 - core index']
  #allocation1 [shape = 'u32[144,128]{1,0:T(1,128)}', space=vmem, size = 0x12000, scoped, tag = 'internal scratch']
  #allocation2 [shape = 'f32[2,128]{1,0:T(2,128)}', space=vmem, size = 0x400, scoped, tag = 'scratch operand']
  %s0 = inlined_call_operand.hbm [shape: bf16[2,4,256], index: 0, kind: input, shape index: {}]
  %s1 = inlined_call_operand.vmem [shape: bf16[4,128], index: 1, kind: input, shape index: {}]
  %s2 = inlined_call_operand.vmem [shape: f32[1,128], index: 2, kind: input, shape index: {}]
  %s3 = inlined_call_operand.hbm [shape: bf16[128,128], index: 3, kind: input, shape index: {}]
  %s4 = inlined_call_operand.vmem [shape: f32[1,128], index: 4, kind: input, shape index: {}]
  %s5 = inlined_call_operand.hbm [shape: bf16[128,128], index: 5, kind: input, shape index: {}]
  %s6 = inlined_call_operand.vmem [shape: f32[1,128], index: 6, kind: input, shape index: {}]
  %s7 = inlined_call_operand.hbm [shape: f32[2,128], index: 7, kind: output, shape index: {}]
  %s8 = sld [smem:[#allocation0]]
  $region50: #{tpu_custom_call.1} parent=0
    _
  %s10 = ssub.s32 1, %s8
  %s11 = scalar_select 0, %s10, %s8
  $region1: #{tpu_custom_call.1} parent=0
    #allocation3 [shape = 'u8[4096]{0}', space=vmem, size = 0x1000, scoped, tag = 'input window, operand 0, single buffered']
    #allocation4 [shape = 's32[1]{0}', space=sflag, size = 0x4, scoped, tag = 'scoped memory for tpu_custom_call.1']
    #allocation5 [shape = 's32[1]{0}', space=sflag, size = 0x4, scoped, tag = 'scoped memory for tpu_custom_call.1']
    #allocation6 [shape = 'u8[32768]{0}', space=vmem, size = 0x8000, scoped, tag = 'input window, operand 3, single buffered']
    #allocation7 [shape = 's32[1]{0}', space=sflag, size = 0x4, scoped, tag = 'scoped memory for tpu_custom_call.1']
    #allocation8 [shape = 'u8[32768]{0}', space=vmem, size = 0x8000, scoped, tag = 'input window, operand 5, single buffered']
    #allocation9 [shape = 'u8[1024]{0}', space=vmem, size = 0x400, scoped, tag = 'output window, operand 0, single buffered']
    %12 = vsyncpa [#allocation4], 0
    %13 = vsyncpa [#allocation7], 0
    %14 = vsyncpa [#allocation5], 0
    // Predicated region
    $region2: #{tpu_custom_call.1} parent=1 // pred_check
      _
    $region3: #{tpu_custom_call.1} parent=1 // pred_check_branch
      %16 = sbr.rel (0) target = $region5
    $region4: #{tpu_custom_call.1} parent=1 // pred_region
      %s18 = ssub.s32 128, 128
      %19 = vsyncadd [#allocation4], %s18
      %s20 = sshll.u32 [#allocation3], 4
      %s21 = int_to_ptr.vmem [resolvable:$true] %s20
      %26 = dma.hbm_to_vmem [thread:$0]  %s0, 128, %s21, [#allocation4], 64, 64, 4
    $region5: #{tpu_custom_call.1} parent=1 // pred_fallthru
      _
    // Predicated region
    $region6: #{tpu_custom_call.1} parent=1 // pred_check
      _
    $region7: #{tpu_custom_call.1} parent=1 // pred_check_branch
      %28 = sbr.rel (0) target = $region9
    $region8: #{tpu_custom_call.1} parent=1 // pred_region
      _
    $region9: #{tpu_custom_call.1} parent=1 // pred_fallthru
      _
    // Predicated region
    $region10: #{tpu_custom_call.1} parent=1 // pred_check
      _
    $region11: #{tpu_custom_call.1} parent=1 // pred_check_branch
      %30 = sbr.rel (0) target = $region13
    $region12: #{tpu_custom_call.1} parent=1 // pred_region
      _
    $region13: #{tpu_custom_call.1} parent=1 // pred_fallthru
      _
    // Predicated region
    $region14: #{tpu_custom_call.1} parent=1 // pred_check
      _
    $region15: #{tpu_custom_call.1} parent=1 // pred_check_branch
      %32 = sbr.rel (0) target = $region17
    $region16: #{tpu_custom_call.1} parent=1 // pred_region
      %s34 = ssub.s32 1024, 1024
      %35 = vsyncadd [#allocation7], %s34
      %s36 = sshll.u32 [#allocation6], 4
      %s37 = int_to_ptr.vmem [resolvable:$true] %s36
      %42 = dma.hbm_to_vmem [thread:$0]  %s3, 1024, %s37, [#allocation7], 64, 64, 4
    $region17: #{tpu_custom_call.1} parent=1 // pred_fallthru
      _
    // Predicated region
    $region18: #{tpu_custom_call.1} parent=1 // pred_check
      _
    $region19: #{tpu_custom_call.1} parent=1 // pred_check_branch
      %44 = sbr.rel (0) target = $region21
    $region20: #{tpu_custom_call.1} parent=1 // pred_region
      _
    $region21: #{tpu_custom_call.1} parent=1 // pred_fallthru
      _
    // Predicated region
    $region22: #{tpu_custom_call.1} parent=1 // pred_check
      _
    $region23: #{tpu_custom_call.1} parent=1 // pred_check_branch
      %46 = sbr.rel (0) target = $region25
    $region24: #{tpu_custom_call.1} parent=1 // pred_region
      %s48 = ssub.s32 1024, 1024
      %49 = vsyncadd [#allocation7], %s48
      %s50 = sshll.u32 [#allocation8], 4
      %s51 = int_to_ptr.vmem [resolvable:$true] %s50
      %56 = dma.hbm_to_vmem [thread:$0]  %s5, 1024, %s51, [#allocation7], 64, 64, 4
    $region25: #{tpu_custom_call.1} parent=1 // pred_fallthru
      _
    // Predicated region
    $region26: #{tpu_custom_call.1} parent=1 // pred_check
      _
    $region27: #{tpu_custom_call.1} parent=1 // pred_check_branch
      %58 = sbr.rel (0) target = $region29
    $region28: #{tpu_custom_call.1} parent=1 // pred_region
      _
    $region29: #{tpu_custom_call.1} parent=1 // pred_fallthru
      _
    // Predicated region
    $region30: #{tpu_custom_call.1} parent=1 // pred_check
      _
    $region31: #{tpu_custom_call.1} parent=1 // pred_check_branch
      %60 = sbr.rel (0) target = $region33
    $region32: #{tpu_custom_call.1} parent=1 // pred_region
      %61 = dma.done [#allocation4], 128
    $region33: #{tpu_custom_call.1} parent=1 // pred_fallthru
      _
    // Predicated region
    $region34: #{tpu_custom_call.1} parent=1 // pred_check
      _
    $region35: #{tpu_custom_call.1} parent=1 // pred_check_branch
      %63 = sbr.rel (0) target = $region37
    $region36: #{tpu_custom_call.1} parent=1 // pred_region
      %64 = dma.done [#allocation7], 1024
    $region37: #{tpu_custom_call.1} parent=1 // pred_fallthru
      _
    // Predicated region
    $region38: #{tpu_custom_call.1} parent=1 // pred_check
      _
    $region39: #{tpu_custom_call.1} parent=1 // pred_check_branch
      %66 = sbr.rel (0) target = $region41
    $region40: #{tpu_custom_call.1} parent=1 // pred_region
      %67 = dma.done [#allocation7], 1024
    $region41: #{tpu_custom_call.1} parent=1 // pred_fallthru
      _
    %v70 = vld [vmem:[#allocation3] sm:$0xf]
    %v71 = vld [vmem:[%s1] sm:$0x3]
    %v72 = vld [vmem:[%s2] sm:$0x1]
    %v74 = vlaneseq
    %v75 = vshrl.u32 %v74, 7
    %v76 = vsub.s32 0, %v75
    %v77 = vrot.slane %v72, %v76
    %v81 = vunpack.c.l.s4 1983009808
    %v82 = vunpack.c.0.s8 %v81
    %v83 = vlaneseq
    %v84 = vshrl.u32 %v83, 7
    %v85 = vsub.s32 %v82, %v84
    %v86 = vrot.slane %v70, %v85
    %v87 = vcombine.high %v86, %v86
    %90 = vxpose.xlu0.c.b16.start [1/8] %v86, 128
    %91 = vxpose.xlu0.c.b16.cont [2/8] 0, 128
    %92 = vxpose.xlu0.c.b16.cont [3/8] 0, 128
    %93 = vxpose.xlu0.c.b16.cont [4/8] 0, 128
    %94 = vxpose.xlu0.c.b16.cont [5/8] 0, 128
    %95 = vxpose.xlu0.c.b16.cont [6/8] 0, 128
    %96 = vxpose.xlu0.c.b16.cont [7/8] 0, 128
    %97 = vxpose.xlu0.c.b16.end [8/8] 0, 128
    %v98 = vpop.trf.xlu0
    %v99 = vpop.trf.xlu0
    %v100 = vpop.trf.xlu0
    %v101 = vpop.trf.xlu0
    %v102 = vpop.trf.xlu0
    %v103 = vpop.trf.xlu0
    %v104 = vpop.trf.xlu0
    %v105 = vpop.trf.xlu0
    %106 = vxpose.xlu0.c.b16.start [1/8] %v87, 128
    %107 = vxpose.xlu0.c.b16.cont [2/8] 0, 128
    %108 = vxpose.xlu0.c.b16.cont [3/8] 0, 128
    %109 = vxpose.xlu0.c.b16.cont [4/8] 0, 128
    %110 = vxpose.xlu0.c.b16.cont [5/8] 0, 128
    %111 = vxpose.xlu0.c.b16.cont [6/8] 0, 128
    %112 = vxpose.xlu0.c.b16.cont [7/8] 0, 128
    %113 = vxpose.xlu0.c.b16.end [8/8] 0, 128
    %v114 = vpop.trf.xlu0
    %v115 = vpop.trf.xlu0
    %v116 = vpop.trf.xlu0
    %v117 = vpop.trf.xlu0
    %v118 = vpop.trf.xlu0
    %v119 = vpop.trf.xlu0
    %v120 = vpop.trf.xlu0
    %v121 = vpop.trf.xlu0
    %vm122 = vcmask 31744
    %v124 = vsel %vm122, %v98, 0
    %v127 = vsel %vm122, %v99, 0
    %v130 = vsel %vm122, %v100, 0
    %v133 = vsel %vm122, %v101, 0
    %v136 = vsel %vm122, %v102, 0
    %v139 = vsel %vm122, %v103, 0
    %v142 = vsel %vm122, %v104, 0
    %v145 = vsel %vm122, %v105, 0
    %v148 = vsel %vm122, %v114, 0
    %v151 = vsel %vm122, %v115, 0
    %v154 = vsel %vm122, %v116, 0
    %v157 = vsel %vm122, %v117, 0
    %v160 = vsel %vm122, %v118, 0
    %v163 = vsel %vm122, %v119, 0
    %v166 = vsel %vm122, %v120, 0
    %v169 = vsel %vm122, %v121, 0
    %vm171 = vcmask 1041408
    %v173 = vsel %vm171, %v71, 0
    %175 = vmatprep.subr.bf16.mxu0 0
    %176 = vmatpush1.bf16.msra.mxu0 %v173
    %177 = vmatprep.subr.bf16.mxu0 0
    %178 = vmatpush1.bf16.msra.mxu0 0
    %179 = vmatprep.subr.bf16.mxu0 0
    %180 = vmatpush1.bf16.msra.mxu0 0
    %181 = vmatprep.subr.bf16.mxu0 0
    %182 = vmatpush1.bf16.msra.mxu0 0
    %183 = vmatprep.subr.bf16.mxu0 0
    %184 = vmatpush1.bf16.msra.mxu0 0
    %185 = vmatprep.subr.bf16.mxu0 0
    %186 = vmatpush1.bf16.msra.mxu0 0
    %187 = vmatprep.subr.bf16.mxu0 0
    %188 = vmatpush1.bf16.msra.mxu0 0
    %189 = vmatprep.subr.bf16.mxu0 0
    %190 = vmatpush1.bf16.msra.mxu0 0
    %191 = vmatprep.subr.bf16.mxu0 0
    %192 = vmatpush1.bf16.msra.mxu0 0
    %193 = vmatprep.subr.bf16.mxu0 0
    %194 = vmatpush1.bf16.msra.mxu0 0
    %195 = vmatprep.subr.bf16.mxu0 0
    %196 = vmatpush1.bf16.msra.mxu0 0
    %197 = vmatprep.subr.bf16.mxu0 0
    %198 = vmatpush1.bf16.msra.mxu0 0
    %199 = vmatprep.subr.bf16.mxu0 0
    %200 = vmatpush1.bf16.msra.mxu0 0
    %201 = vmatprep.subr.bf16.mxu0 0
    %202 = vmatpush1.bf16.msra.mxu0 0
    %203 = vmatprep.subr.bf16.mxu0 0
    %204 = vmatpush1.bf16.msra.mxu0 0
    %205 = vmatprep.subr.bf16.mxu0 0
    %206 = vmatpush1.bf16.msra.mxu0 0
    %207 = vmatprep.mubr.bf16.mxu0 0
    %208 = vmatmul.mubr.bf16.gmra.mrb[0].mxu0 %v124
    %v209 = vpop.f32.mrb[0].mxu0
    %v210 = vadd.f32 %v77, %v209
    %v211 = vpop.f32.mrb[0].mxu0
    %v212 = vpop.f32.mrb[0].mxu0
    %v213 = vadd.f32 %v77, %v212
    %v214 = vpop.f32.mrb[0].mxu0
    %215 = vmatprep.mubr.bf16.mxu0 0
    %216 = vmatmul.mubr.bf16.gmra.mrb[0].mxu0 %v127
    %v217 = vpop.f32.mrb[0].mxu0
    %v218 = vadd.f32 %v77, %v217
    %v219 = vpop.f32.mrb[0].mxu0
    %v220 = vpop.f32.mrb[0].mxu0
    %v221 = vadd.f32 %v77, %v220
    %v222 = vpop.f32.mrb[0].mxu0
    %223 = vmatprep.mubr.bf16.mxu0 0
    %224 = vmatmul.mubr.bf16.gmra.mrb[0].mxu0 %v130
    %v225 = vpop.f32.mrb[0].mxu0
    %v226 = vadd.f32 %v77, %v225
    %v227 = vpop.f32.mrb[0].mxu0
    %v228 = vpop.f32.mrb[0].mxu0
    %v229 = vadd.f32 %v77, %v228
    %v230 = vpop.f32.mrb[0].mxu0
    %231 = vmatprep.mubr.bf16.mxu0 0
    %232 = vmatmul.mubr.bf16.gmra.mrb[0].mxu0 %v133
    %v233 = vpop.f32.mrb[0].mxu0
    %v234 = vadd.f32 %v77, %v233
    %v235 = vpop.f32.mrb[0].mxu0
    %v236 = vpop.f32.mrb[0].mxu0
    %v237 = vadd.f32 %v77, %v236
    %v238 = vpop.f32.mrb[0].mxu0
    %239 = vmatprep.mubr.bf16.mxu0 0
    %240 = vmatmul.mubr.bf16.gmra.mrb[0].mxu0 %v136
    %v241 = vpop.f32.mrb[0].mxu0
    %v242 = vadd.f32 %v77, %v241
    %v243 = vpop.f32.mrb[0].mxu0
    %v244 = vpop.f32.mrb[0].mxu0
    %v245 = vadd.f32 %v77, %v244
    %v246 = vpop.f32.mrb[0].mxu0
    %247 = vmatprep.mubr.bf16.mxu0 0
    %248 = vmatmul.mubr.bf16.gmra.mrb[0].mxu0 %v139
    %v249 = vpop.f32.mrb[0].mxu0
    %v250 = vadd.f32 %v77, %v249
    %v251 = vpop.f32.mrb[0].mxu0
    %v252 = vpop.f32.mrb[0].mxu0
    %v253 = vadd.f32 %v77, %v252
    %v254 = vpop.f32.mrb[0].mxu0
    %255 = vmatprep.mubr.bf16.mxu0 0
    %256 = vmatmul.mubr.bf16.gmra.mrb[0].mxu0 %v142
    %v257 = vpop.f32.mrb[0].mxu0
    %v258 = vadd.f32 %v77, %v257
    %v259 = vpop.f32.mrb[0].mxu0
    %v260 = vpop.f32.mrb[0].mxu0
    %v261 = vadd.f32 %v77, %v260
    %v262 = vpop.f32.mrb[0].mxu0
    %263 = vmatprep.mubr.bf16.mxu0 0
    %264 = vmatmul.mubr.bf16.gmra.mrb[0].mxu0 %v145
    %v265 = vpop.f32.mrb[0].mxu0
    %v266 = vadd.f32 %v77, %v265
    %v267 = vpop.f32.mrb[0].mxu0
    %v268 = vpop.f32.mrb[0].mxu0
    %v269 = vadd.f32 %v77, %v268
    %v270 = vpop.f32.mrb[0].mxu0
    %271 = vmatprep.mubr.bf16.mxu0 0
    %272 = vmatmul.mubr.bf16.gmra.mrb[0].mxu0 %v148
    %v273 = vpop.f32.mrb[0].mxu0
    %v274 = vadd.f32 %v77, %v273
    %v275 = vpop.f32.mrb[0].mxu0
    %v276 = vpop.f32.mrb[0].mxu0
    %v277 = vadd.f32 %v77, %v276
    %v278 = vpop.f32.mrb[0].mxu0
    %279 = vmatprep.mubr.bf16.mxu0 0
    %280 = vmatmul.mubr.bf16.gmra.mrb[0].mxu0 %v151
    %v281 = vpop.f32.mrb[0].mxu0
    %v282 = vadd.f32 %v77, %v281
    %v283 = vpop.f32.mrb[0].mxu0
    %v284 = vpop.f32.mrb[0].mxu0
    %v285 = vadd.f32 %v77, %v284
    %v286 = vpop.f32.mrb[0].mxu0
    %287 = vmatprep.mubr.bf16.mxu0 0
    %288 = vmatmul.mubr.bf16.gmra.mrb[0].mxu0 %v154
    %v289 = vpop.f32.mrb[0].mxu0
    %v290 = vadd.f32 %v77, %v289
    %v291 = vpop.f32.mrb[0].mxu0
    %v292 = vpop.f32.mrb[0].mxu0
    %v293 = vadd.f32 %v77, %v292
    %v294 = vpop.f32.mrb[0].mxu0
    %295 = vmatprep.mubr.bf16.mxu0 0
    %296 = vmatmul.mubr.bf16.gmra.mrb[0].mxu0 %v157
    %v297 = vpop.f32.mrb[0].mxu0
    %v298 = vadd.f32 %v77, %v297
    %v299 = vpop.f32.mrb[0].mxu0
    %v300 = vpop.f32.mrb[0].mxu0
    %v301 = vadd.f32 %v77, %v300
    %v302 = vpop.f32.mrb[0].mxu0
    %303 = vmatprep.mubr.bf16.mxu0 0
    %304 = vmatmul.mubr.bf16.gmra.mrb[0].mxu0 %v160
    %v305 = vpop.f32.mrb[0].mxu0
    %v306 = vadd.f32 %v77, %v305
    %v307 = vpop.f32.mrb[0].mxu0
    %v308 = vpop.f32.mrb[0].mxu0
    %v309 = vadd.f32 %v77, %v308
    %v310 = vpop.f32.mrb[0].mxu0
    %311 = vmatprep.mubr.bf16.mxu0 0
    %312 = vmatmul.mubr.bf16.gmra.mrb[0].mxu0 %v163
    %v313 = vpop.f32.mrb[0].mxu0
    %v314 = vadd.f32 %v77, %v313
    %v315 = vpop.f32.mrb[0].mxu0
    %v316 = vpop.f32.mrb[0].mxu0
    %v317 = vadd.f32 %v77, %v316
    %v318 = vpop.f32.mrb[0].mxu0
    %319 = vmatprep.mubr.bf16.mxu0 0
    %320 = vmatmul.mubr.bf16.gmra.mrb[0].mxu0 %v166
    %v321 = vpop.f32.mrb[0].mxu0
    %v322 = vadd.f32 %v77, %v321
    %v323 = vpop.f32.mrb[0].mxu0
    %v324 = vpop.f32.mrb[0].mxu0
    %v325 = vadd.f32 %v77, %v324
    %v326 = vpop.f32.mrb[0].mxu0
    %327 = vmatprep.mubr.bf16.mxu0 0
    %328 = vmatmul.mubr.bf16.gmra.mrb[0].mxu0 %v169
    %v329 = vpop.f32.mrb[0].mxu0
    %v330 = vadd.f32 %v77, %v329
    %v331 = vpop.f32.mrb[0].mxu0
    %v332 = vpop.f32.mrb[0].mxu0
    %v333 = vadd.f32 %v77, %v332
    %v334 = vpop.f32.mrb[0].mxu0
    %335 = vdwg.mxu0
    %v336 = vpack.c.bf16 %v213, %v210
    %v337 = vpack.c.bf16 %v221, %v218
    %v338 = vpack.c.bf16 %v229, %v226
    %v339 = vpack.c.bf16 %v237, %v234
    %v340 = vpack.c.bf16 %v245, %v242
    %v341 = vpack.c.bf16 %v253, %v250
    %v342 = vpack.c.bf16 %v261, %v258
    %v343 = vpack.c.bf16 %v269, %v266
    %v344 = vpack.c.bf16 %v277, %v274
    %v345 = vpack.c.bf16 %v285, %v282
    %v346 = vpack.c.bf16 %v293, %v290
    %v347 = vpack.c.bf16 %v301, %v298
    %v348 = vpack.c.bf16 %v309, %v306
    %v349 = vpack.c.bf16 %v317, %v314
    %v350 = vpack.c.bf16 %v325, %v322
    %v351 = vpack.c.bf16 %v333, %v330
    %v352 = vxor.u32 %v336, 2147516416
    %v353 = vxor.u32 %v337, 2147516416
    %v354 = vxor.u32 %v338, 2147516416
    %v355 = vxor.u32 %v339, 2147516416
    %v356 = vxor.u32 %v340, 2147516416
    %v357 = vxor.u32 %v341, 2147516416
    %v358 = vxor.u32 %v342, 2147516416
    %v359 = vxor.u32 %v343, 2147516416
    %v360 = vxor.u32 %v344, 2147516416
    %v361 = vxor.u32 %v345, 2147516416
    %v362 = vxor.u32 %v346, 2147516416
    %v363 = vxor.u32 %v347, 2147516416
    %v364 = vxor.u32 %v348, 2147516416
    %v365 = vxor.u32 %v349, 2147516416
    %v366 = vxor.u32 %v350, 2147516416
    %v367 = vxor.u32 %v351, 2147516416
    %v369 = vmul.bf16 %v352, 1069105081
    %v370 = vpow.bf16.pop %v369
    %v372 = vmul.bf16 %v353, 1069105081
    %v373 = vpow.bf16.pop %v372
    %v375 = vmul.bf16 %v354, 1069105081
    %v376 = vpow.bf16.pop %v375
    %v378 = vmul.bf16 %v355, 1069105081
    %v379 = vpow.bf16.pop %v378
    %v381 = vmul.bf16 %v356, 1069105081
    %v382 = vpow.bf16.pop %v381
    %v384 = vmul.bf16 %v357, 1069105081
    %v385 = vpow.bf16.pop %v384
    %v387 = vmul.bf16 %v358, 1069105081
    %v388 = vpow.bf16.pop %v387
    %v390 = vmul.bf16 %v359, 1069105081
    %v391 = vpow.bf16.pop %v390
    %v393 = vmul.bf16 %v360, 1069105081
    %v394 = vpow.bf16.pop %v393
    %v396 = vmul.bf16 %v361, 1069105081
    %v397 = vpow.bf16.pop %v396
    %v399 = vmul.bf16 %v362, 1069105081
    %v400 = vpow.bf16.pop %v399
    %v402 = vmul.bf16 %v363, 1069105081
    %v403 = vpow.bf16.pop %v402
    %v405 = vmul.bf16 %v364, 1069105081
    %v406 = vpow.bf16.pop %v405
    %v408 = vmul.bf16 %v365, 1069105081
    %v409 = vpow.bf16.pop %v408
    %v411 = vmul.bf16 %v366, 1069105081
    %v412 = vpow.bf16.pop %v411
    %v414 = vmul.bf16 %v367, 1069105081
    %v415 = vpow.bf16.pop %v414
    %v416 = vadd.bf16 %v370, 1065369472
    %v417 = vadd.bf16 %v373, 1065369472
    %v418 = vadd.bf16 %v376, 1065369472
    %v419 = vadd.bf16 %v379, 1065369472
    %v420 = vadd.bf16 %v382, 1065369472
    %v421 = vadd.bf16 %v385, 1065369472
    %v422 = vadd.bf16 %v388, 1065369472
    %v423 = vadd.bf16 %v391, 1065369472
    %v424 = vadd.bf16 %v394, 1065369472
    %v425 = vadd.bf16 %v397, 1065369472
    %v426 = vadd.bf16 %v400, 1065369472
    %v427 = vadd.bf16 %v403, 1065369472
    %v428 = vadd.bf16 %v406, 1065369472
    %v429 = vadd.bf16 %v409, 1065369472
    %v430 = vadd.bf16 %v412, 1065369472
    %v431 = vadd.bf16 %v415, 1065369472
    %v432 = vrcp.bf16.pop %v416
    %v433 = vmul.bf16 1065369472, %v432
    %v434 = vrcp.bf16.pop %v417
    %v435 = vmul.bf16 1065369472, %v434
    %v436 = vrcp.bf16.pop %v418
    %v437 = vmul.bf16 1065369472, %v436
    %v438 = vrcp.bf16.pop %v419
    %v439 = vmul.bf16 1065369472, %v438
    %v440 = vrcp.bf16.pop %v420
    %v441 = vmul.bf16 1065369472, %v440
    %v442 = vrcp.bf16.pop %v421
    %v443 = vmul.bf16 1065369472, %v442
    %v444 = vrcp.bf16.pop %v422
    %v445 = vmul.bf16 1065369472, %v444
    %v446 = vrcp.bf16.pop %v423
    %v447 = vmul.bf16 1065369472, %v446
    %v448 = vrcp.bf16.pop %v424
    %v449 = vmul.bf16 1065369472, %v448
    %v450 = vrcp.bf16.pop %v425
    %v451 = vmul.bf16 1065369472, %v450
    %v452 = vrcp.bf16.pop %v426
    %v453 = vmul.bf16 1065369472, %v452
    %v454 = vrcp.bf16.pop %v427
    %v455 = vmul.bf16 1065369472, %v454
    %v456 = vrcp.bf16.pop %v428
    %v457 = vmul.bf16 1065369472, %v456
    %v458 = vrcp.bf16.pop %v429
    %v459 = vmul.bf16 1065369472, %v458
    %v460 = vrcp.bf16.pop %v430
    %v461 = vmul.bf16 1065369472, %v460
    %v462 = vrcp.bf16.pop %v431
    %v463 = vmul.bf16 1065369472, %v462
    %v464 = vmul.bf16 %v336, %v433
    %v465 = vmul.bf16 %v337, %v435
    %v466 = vmul.bf16 %v338, %v437
    %v467 = vmul.bf16 %v339, %v439
    %v468 = vmul.bf16 %v340, %v441
    %v469 = vmul.bf16 %v341, %v443
    %v470 = vmul.bf16 %v342, %v445
    %v471 = vmul.bf16 %v343, %v447
    %v472 = vmul.bf16 %v344, %v449
    %v473 = vmul.bf16 %v345, %v451
    %v474 = vmul.bf16 %v346, %v453
    %v475 = vmul.bf16 %v347, %v455
    %v476 = vmul.bf16 %v348, %v457
    %v477 = vmul.bf16 %v349, %v459
    %v478 = vmul.bf16 %v350, %v461
    %v479 = vmul.bf16 %v351, %v463
    %480 = vmatprep.subr.bf16.mxu0 0
    %481 = vmatpush1.bf16.msra.mxu0 %v464
    %482 = vmatprep.subr.bf16.mxu0 0
    %483 = vmatpush1.bf16.msra.mxu0 %v465
    %484 = vmatprep.subr.bf16.mxu0 0
    %485 = vmatpush1.bf16.msra.mxu0 %v466
    %486 = vmatprep.subr.bf16.mxu0 0
    %487 = vmatpush1.bf16.msra.mxu0 %v467
    %488 = vmatprep.subr.bf16.mxu0 0
    %489 = vmatpush1.bf16.msra.mxu0 %v468
    %490 = vmatprep.subr.bf16.mxu0 0
    %491 = vmatpush1.bf16.msra.mxu0 %v469
    %492 = vmatprep.subr.bf16.mxu0 0
    %493 = vmatpush1.bf16.msra.mxu0 %v470
    %494 = vmatprep.subr.bf16.mxu0 0
    %495 = vmatpush1.bf16.msra.mxu0 %v471
    %496 = vmatprep.subr.bf16.mxu0 0
    %497 = vmatpush1.bf16.msra.mxu0 %v472
    %498 = vmatprep.subr.bf16.mxu0 0
    %499 = vmatpush1.bf16.msra.mxu0 %v473
    %500 = vmatprep.subr.bf16.mxu0 0
    %501 = vmatpush1.bf16.msra.mxu0 %v474
    %502 = vmatprep.subr.bf16.mxu0 0
    %503 = vmatpush1.bf16.msra.mxu0 %v475
    %504 = vmatprep.subr.bf16.mxu0 0
    %505 = vmatpush1.bf16.msra.mxu0 %v476
    %506 = vmatprep.subr.bf16.mxu0 0
    %507 = vmatpush1.bf16.msra.mxu0 %v477
    %508 = vmatprep.subr.bf16.mxu0 0
    %509 = vmatpush1.bf16.msra.mxu0 %v478
    %510 = vmatprep.subr.bf16.mxu0 0
    %511 = vmatpush1.bf16.msra.mxu0 %v479
    %512 = vmatprep.mubr.bf16.mxu0 1065369472
    %513 = vmatmul.mubr.bf16.gmra.mrb[0].mxu0 1065369472
    %v514 = vpop.f32.mrb[0].mxu0
    %v515 = vadd.f32 0.0, %v514
    %v516 = vpop.f32.mrb[0].mxu0
    %v517 = vpop.f32.mrb[0].mxu0
    %v518 = vpop.f32.mrb[0].mxu0
    %519 = vdwg.mxu0
    %520 = vst [vmem:[#allocation2] sm:$0x1] %v515
    %s521 = scalar_lea.vmem [#allocation3], 4
    %v522 = vld [vmem:[%s521] sm:$0xf]
    %v523 = vld [vmem:[%s1] sm:$0x3]
    %v524 = vld [vmem:[%s2] sm:$0x1]
    %v526 = vlaneseq
    %v527 = vshrl.u32 %v526, 7
    %v528 = vsub.s32 0, %v527
    %v529 = vrot.slane %v524, %v528
    %v533 = vunpack.c.l.s4 1983009808
    %v534 = vunpack.c.0.s8 %v533
    %v535 = vlaneseq
    %v536 = vshrl.u32 %v535, 7
    %v537 = vsub.s32 %v534, %v536
    %v538 = vrot.slane %v522, %v537
    %v539 = vcombine.high %v538, %v538
    %542 = vxpose.xlu0.c.b16.start [1/8] %v538, 128
    %543 = vxpose.xlu0.c.b16.cont [2/8] 0, 128
    %544 = vxpose.xlu0.c.b16.cont [3/8] 0, 128
    %545 = vxpose.xlu0.c.b16.cont [4/8] 0, 128
    %546 = vxpose.xlu0.c.b16.cont [5/8] 0, 128
    %547 = vxpose.xlu0.c.b16.cont [6/8] 0, 128
    %548 = vxpose.xlu0.c.b16.cont [7/8] 0, 128
    %549 = vxpose.xlu0.c.b16.end [8/8] 0, 128
    %v550 = vpop.trf.xlu0
    %v551 = vpop.trf.xlu0
    %v552 = vpop.trf.xlu0
    %v553 = vpop.trf.xlu0
    %v554 = vpop.trf.xlu0
    %v555 = vpop.trf.xlu0
    %v556 = vpop.trf.xlu0
    %v557 = vpop.trf.xlu0
    %558 = vxpose.xlu0.c.b16.start [1/8] %v539, 128
    %559 = vxpose.xlu0.c.b16.cont [2/8] 0, 128
    %560 = vxpose.xlu0.c.b16.cont [3/8] 0, 128
    %561 = vxpose.xlu0.c.b16.cont [4/8] 0, 128
    %562 = vxpose.xlu0.c.b16.cont [5/8] 0, 128
    %563 = vxpose.xlu0.c.b16.cont [6/8] 0, 128
    %564 = vxpose.xlu0.c.b16.cont [7/8] 0, 128
    %565 = vxpose.xlu0.c.b16.end [8/8] 0, 128
    %v566 = vpop.trf.xlu0
    %v567 = vpop.trf.xlu0
    %v568 = vpop.trf.xlu0
    %v569 = vpop.trf.xlu0
    %v570 = vpop.trf.xlu0
    %v571 = vpop.trf.xlu0
    %v572 = vpop.trf.xlu0
    %v573 = vpop.trf.xlu0
    %v575 = vsel %vm122, %v550, 0
    %v578 = vsel %vm122, %v551, 0
    %v581 = vsel %vm122, %v552, 0
    %v584 = vsel %vm122, %v553, 0
    %v587 = vsel %vm122, %v554, 0
    %v590 = vsel %vm122, %v555, 0
    %v593 = vsel %vm122, %v556, 0
    %v596 = vsel %vm122, %v557, 0
    %v599 = vsel %vm122, %v566, 0
    %v602 = vsel %vm122, %v567, 0
    %v605 = vsel %vm122, %v568, 0
    %v608 = vsel %vm122, %v569, 0
    %v611 = vsel %vm122, %v570, 0
    %v614 = vsel %vm122, %v571, 0
    %v617 = vsel %vm122, %v572, 0
    %v620 = vsel %vm122, %v573, 0
    %v623 = vsel %vm171, %v523, 0
    %625 = vmatprep.subr.bf16.mxu0 0
    %626 = vmatpush1.bf16.msra.mxu0 %v623
    %627 = vmatprep.subr.bf16.mxu0 0
    %628 = vmatpush1.bf16.msra.mxu0 0
    %629 = vmatprep.subr.bf16.mxu0 0
    %630 = vmatpush1.bf16.msra.mxu0 0
    %631 = vmatprep.subr.bf16.mxu0 0
    %632 = vmatpush1.bf16.msra.mxu0 0
    %633 = vmatprep.subr.bf16.mxu0 0
    %634 = vmatpush1.bf16.msra.mxu0 0
    %635 = vmatprep.subr.bf16.mxu0 0
    %636 = vmatpush1.bf16.msra.mxu0 0
    %637 = vmatprep.subr.bf16.mxu0 0
    %638 = vmatpush1.bf16.msra.mxu0 0
    %639 = vmatprep.subr.bf16.mxu0 0
    %640 = vmatpush1.bf16.msra.mxu0 0
    %641 = vmatprep.subr.bf16.mxu0 0
    %642 = vmatpush1.bf16.msra.mxu0 0
    %643 = vmatprep.subr.bf16.mxu0 0
    %644 = vmatpush1.bf16.msra.mxu0 0
    %645 = vmatprep.subr.bf16.mxu0 0
    %646 = vmatpush1.bf16.msra.mxu0 0
    %647 = vmatprep.subr.bf16.mxu0 0
    %648 = vmatpush1.bf16.msra.mxu0 0
    %649 = vmatprep.subr.bf16.mxu0 0
    %650 = vmatpush1.bf16.msra.mxu0 0
    %651 = vmatprep.subr.bf16.mxu0 0
    %652 = vmatpush1.bf16.msra.mxu0 0
    %653 = vmatprep.subr.bf16.mxu0 0
    %654 = vmatpush1.bf16.msra.mxu0 0
    %655 = vmatprep.subr.bf16.mxu0 0
    %656 = vmatpush1.bf16.msra.mxu0 0
    %657 = vmatprep.mubr.bf16.mxu0 0
    %658 = vmatmul.mubr.bf16.gmra.mrb[0].mxu0 %v575
    %v659 = vpop.f32.mrb[0].mxu0
    %v660 = vadd.f32 %v529, %v659
    %v661 = vpop.f32.mrb[0].mxu0
    %v662 = vpop.f32.mrb[0].mxu0
    %v663 = vadd.f32 %v529, %v662
    %v664 = vpop.f32.mrb[0].mxu0
    %665 = vmatprep.mubr.bf16.mxu0 0
    %666 = vmatmul.mubr.bf16.gmra.mrb[0].mxu0 %v578
    %v667 = vpop.f32.mrb[0].mxu0
    %v668 = vadd.f32 %v529, %v667
    %v669 = vpop.f32.mrb[0].mxu0
    %v670 = vpop.f32.mrb[0].mxu0
    %v671 = vadd.f32 %v529, %v670
    %v672 = vpop.f32.mrb[0].mxu0
    %673 = vmatprep.mubr.bf16.mxu0 0
    %674 = vmatmul.mubr.bf16.gmra.mrb[0].mxu0 %v581
    %v675 = vpop.f32.mrb[0].mxu0
    %v676 = vadd.f32 %v529, %v675
    %v677 = vpop.f32.mrb[0].mxu0
    %v678 = vpop.f32.mrb[0].mxu0
    %v679 = vadd.f32 %v529, %v678
    %v680 = vpop.f32.mrb[0].mxu0
    %681 = vmatprep.mubr.bf16.mxu0 0
    %682 = vmatmul.mubr.bf16.gmra.mrb[0].mxu0 %v584
    %v683 = vpop.f32.mrb[0].mxu0
    %v684 = vadd.f32 %v529, %v683
    %v685 = vpop.f32.mrb[0].mxu0
    %v686 = vpop.f32.mrb[0].mxu0
    %v687 = vadd.f32 %v529, %v686
    %v688 = vpop.f32.mrb[0].mxu0
    %689 = vmatprep.mubr.bf16.mxu0 0
    %690 = vmatmul.mubr.bf16.gmra.mrb[0].mxu0 %v587
    %v691 = vpop.f32.mrb[0].mxu0
    %v692 = vadd.f32 %v529, %v691
    %v693 = vpop.f32.mrb[0].mxu0
    %v694 = vpop.f32.mrb[0].mxu0
    %v695 = vadd.f32 %v529, %v694
    %v696 = vpop.f32.mrb[0].mxu0
    %697 = vmatprep.mubr.bf16.mxu0 0
    %698 = vmatmul.mubr.bf16.gmra.mrb[0].mxu0 %v590
    %v699 = vpop.f32.mrb[0].mxu0
    %v700 = vadd.f32 %v529, %v699
    %v701 = vpop.f32.mrb[0].mxu0
    %v702 = vpop.f32.mrb[0].mxu0
    %v703 = vadd.f32 %v529, %v702
    %v704 = vpop.f32.mrb[0].mxu0
    %705 = vmatprep.mubr.bf16.mxu0 0
    %706 = vmatmul.mubr.bf16.gmra.mrb[0].mxu0 %v593
    %v707 = vpop.f32.mrb[0].mxu0
    %v708 = vadd.f32 %v529, %v707
    %v709 = vpop.f32.mrb[0].mxu0
    %v710 = vpop.f32.mrb[0].mxu0
    %v711 = vadd.f32 %v529, %v710
    %v712 = vpop.f32.mrb[0].mxu0
    %713 = vmatprep.mubr.bf16.mxu0 0
    %714 = vmatmul.mubr.bf16.gmra.mrb[0].mxu0 %v596
    %v715 = vpop.f32.mrb[0].mxu0
    %v716 = vadd.f32 %v529, %v715
    %v717 = vpop.f32.mrb[0].mxu0
    %v718 = vpop.f32.mrb[0].mxu0
    %v719 = vadd.f32 %v529, %v718
    %v720 = vpop.f32.mrb[0].mxu0
    %721 = vmatprep.mubr.bf16.mxu0 0
    %722 = vmatmul.mubr.bf16.gmra.mrb[0].mxu0 %v599
    %v723 = vpop.f32.mrb[0].mxu0
    %v724 = vadd.f32 %v529, %v723
    %v725 = vpop.f32.mrb[0].mxu0
    %v726 = vpop.f32.mrb[0].mxu0
    %v727 = vadd.f32 %v529, %v726
    %v728 = vpop.f32.mrb[0].mxu0
    %729 = vmatprep.mubr.bf16.mxu0 0
    %730 = vmatmul.mubr.bf16.gmra.mrb[0].mxu0 %v602
    %v731 = vpop.f32.mrb[0].mxu0
    %v732 = vadd.f32 %v529, %v731
    %v733 = vpop.f32.mrb[0].mxu0
    %v734 = vpop.f32.mrb[0].mxu0
    %v735 = vadd.f32 %v529, %v734
    %v736 = vpop.f32.mrb[0].mxu0
    %737 = vmatprep.mubr.bf16.mxu0 0
    %738 = vmatmul.mubr.bf16.gmra.mrb[0].mxu0 %v605
    %v739 = vpop.f32.mrb[0].mxu0
    %v740 = vadd.f32 %v529, %v739
    %v741 = vpop.f32.mrb[0].mxu0
    %v742 = vpop.f32.mrb[0].mxu0
    %v743 = vadd.f32 %v529, %v742
    %v744 = vpop.f32.mrb[0].mxu0
    %745 = vmatprep.mubr.bf16.mxu0 0
    %746 = vmatmul.mubr.bf16.gmra.mrb[0].mxu0 %v608
    %v747 = vpop.f32.mrb[0].mxu0
    %v748 = vadd.f32 %v529, %v747
    %v749 = vpop.f32.mrb[0].mxu0
    %v750 = vpop.f32.mrb[0].mxu0
    %v751 = vadd.f32 %v529, %v750
    %v752 = vpop.f32.mrb[0].mxu0
    %753 = vmatprep.mubr.bf16.mxu0 0
    %754 = vmatmul.mubr.bf16.gmra.mrb[0].mxu0 %v611
    %v755 = vpop.f32.mrb[0].mxu0
    %v756 = vadd.f32 %v529, %v755
    %v757 = vpop.f32.mrb[0].mxu0
    %v758 = vpop.f32.mrb[0].mxu0
    %v759 = vadd.f32 %v529, %v758
    %v760 = vpop.f32.mrb[0].mxu0
    %761 = vmatprep.mubr.bf16.mxu0 0
    %762 = vmatmul.mubr.bf16.gmra.mrb[0].mxu0 %v614
    %v763 = vpop.f32.mrb[0].mxu0
    %v764 = vadd.f32 %v529, %v763
    %v765 = vpop.f32.mrb[0].mxu0
    %v766 = vpop.f32.mrb[0].mxu0
    %v767 = vadd.f32 %v529, %v766
    %v768 = vpop.f32.mrb[0].mxu0
    %769 = vmatprep.mubr.bf16.mxu0 0
    %770 = vmatmul.mubr.bf16.gmra.mrb[0].mxu0 %v617
    %v771 = vpop.f32.mrb[0].mxu0
    %v772 = vadd.f32 %v529, %v771
    %v773 = vpop.f32.mrb[0].mxu0
    %v774 = vpop.f32.mrb[0].mxu0
    %v775 = vadd.f32 %v529, %v774
    %v776 = vpop.f32.mrb[0].mxu0
    %777 = vmatprep.mubr.bf16.mxu0 0
    %778 = vmatmul.mubr.bf16.gmra.mrb[0].mxu0 %v620
    %v779 = vpop.f32.mrb[0].mxu0
    %v780 = vadd.f32 %v529, %v779
    %v781 = vpop.f32.mrb[0].mxu0
    %v782 = vpop.f32.mrb[0].mxu0
    %v783 = vadd.f32 %v529, %v782
    %v784 = vpop.f32.mrb[0].mxu0
    %785 = vdwg.mxu0
    %v786 = vpack.c.bf16 %v663, %v660
    %v787 = vpack.c.bf16 %v671, %v668
    %v788 = vpack.c.bf16 %v679, %v676
    %v789 = vpack.c.bf16 %v687, %v684
    %v790 = vpack.c.bf16 %v695, %v692
    %v791 = vpack.c.bf16 %v703, %v700
    %v792 = vpack.c.bf16 %v711, %v708
    %v793 = vpack.c.bf16 %v719, %v716
    %v794 = vpack.c.bf16 %v727, %v724
    %v795 = vpack.c.bf16 %v735, %v732
    %v796 = vpack.c.bf16 %v743, %v740
    %v797 = vpack.c.bf16 %v751, %v748
    %v798 = vpack.c.bf16 %v759, %v756
    %v799 = vpack.c.bf16 %v767, %v764
    %v800 = vpack.c.bf16 %v775, %v772
    %v801 = vpack.c.bf16 %v783, %v780
    %v802 = vxor.u32 %v786, 2147516416
    %v803 = vxor.u32 %v787, 2147516416
    %v804 = vxor.u32 %v788, 2147516416
    %v805 = vxor.u32 %v789, 2147516416
    %v806 = vxor.u32 %v790, 2147516416
    %v807 = vxor.u32 %v791, 2147516416
    %v808 = vxor.u32 %v792, 2147516416
    %v809 = vxor.u32 %v793, 2147516416
    %v810 = vxor.u32 %v794, 2147516416
    %v811 = vxor.u32 %v795, 2147516416
    %v812 = vxor.u32 %v796, 2147516416
    %v813 = vxor.u32 %v797, 2147516416
    %v814 = vxor.u32 %v798, 2147516416
    %v815 = vxor.u32 %v799, 2147516416
    %v816 = vxor.u32 %v800, 2147516416
    %v817 = vxor.u32 %v801, 2147516416
    %v819 = vmul.bf16 %v802, 1069105081
    %v820 = vpow.bf16.pop %v819
    %v822 = vmul.bf16 %v803, 1069105081
    %v823 = vpow.bf16.pop %v822
    %v825 = vmul.bf16 %v804, 1069105081
    %v826 = vpow.bf16.pop %v825
    %v828 = vmul.bf16 %v805, 1069105081
    %v829 = vpow.bf16.pop %v828
    %v831 = vmul.bf16 %v806, 1069105081
    %v832 = vpow.bf16.pop %v831
    %v834 = vmul.bf16 %v807, 1069105081
    %v835 = vpow.bf16.pop %v834
    %v837 = vmul.bf16 %v808, 1069105081
    %v838 = vpow.bf16.pop %v837
    %v840 = vmul.bf16 %v809, 1069105081
    %v841 = vpow.bf16.pop %v840
    %v843 = vmul.bf16 %v810, 1069105081
    %v844 = vpow.bf16.pop %v843
    %v846 = vmul.bf16 %v811, 1069105081
    %v847 = vpow.bf16.pop %v846
    %v849 = vmul.bf16 %v812, 1069105081
    %v850 = vpow.bf16.pop %v849
    %v852 = vmul.bf16 %v813, 1069105081
    %v853 = vpow.bf16.pop %v852
    %v855 = vmul.bf16 %v814, 1069105081
    %v856 = vpow.bf16.pop %v855
    %v858 = vmul.bf16 %v815, 1069105081
    %v859 = vpow.bf16.pop %v858
    %v861 = vmul.bf16 %v816, 1069105081
    %v862 = vpow.bf16.pop %v861
    %v864 = vmul.bf16 %v817, 1069105081
    %v865 = vpow.bf16.pop %v864
    %v866 = vadd.bf16 %v820, 1065369472
    %v867 = vadd.bf16 %v823, 1065369472
    %v868 = vadd.bf16 %v826, 1065369472
    %v869 = vadd.bf16 %v829, 1065369472
    %v870 = vadd.bf16 %v832, 1065369472
    %v871 = vadd.bf16 %v835, 1065369472
    %v872 = vadd.bf16 %v838, 1065369472
    %v873 = vadd.bf16 %v841, 1065369472
    %v874 = vadd.bf16 %v844, 1065369472
    %v875 = vadd.bf16 %v847, 1065369472
    %v876 = vadd.bf16 %v850, 1065369472
    %v877 = vadd.bf16 %v853, 1065369472
    %v878 = vadd.bf16 %v856, 1065369472
    %v879 = vadd.bf16 %v859, 1065369472
    %v880 = vadd.bf16 %v862, 1065369472
    %v881 = vadd.bf16 %v865, 1065369472
    %v882 = vrcp.bf16.pop %v866
    %v883 = vmul.bf16 1065369472, %v882
    %v884 = vrcp.bf16.pop %v867
    %v885 = vmul.bf16 1065369472, %v884
    %v886 = vrcp.bf16.pop %v868
    %v887 = vmul.bf16 1065369472, %v886
    %v888 = vrcp.bf16.pop %v869
    %v889 = vmul.bf16 1065369472, %v888
    %v890 = vrcp.bf16.pop %v870
    %v891 = vmul.bf16 1065369472, %v890
    %v892 = vrcp.bf16.pop %v871
    %v893 = vmul.bf16 1065369472, %v892
    %v894 = vrcp.bf16.pop %v872
    %v895 = vmul.bf16 1065369472, %v894
    %v896 = vrcp.bf16.pop %v873
    %v897 = vmul.bf16 1065369472, %v896
    %v898 = vrcp.bf16.pop %v874
    %v899 = vmul.bf16 1065369472, %v898
    %v900 = vrcp.bf16.pop %v875
    %v901 = vmul.bf16 1065369472, %v900
    %v902 = vrcp.bf16.pop %v876
    %v903 = vmul.bf16 1065369472, %v902
    %v904 = vrcp.bf16.pop %v877
    %v905 = vmul.bf16 1065369472, %v904
    %v906 = vrcp.bf16.pop %v878
    %v907 = vmul.bf16 1065369472, %v906
    %v908 = vrcp.bf16.pop %v879
    %v909 = vmul.bf16 1065369472, %v908
    %v910 = vrcp.bf16.pop %v880
    %v911 = vmul.bf16 1065369472, %v910
    %v912 = vrcp.bf16.pop %v881
    %v913 = vmul.bf16 1065369472, %v912
    %v914 = vmul.bf16 %v786, %v883
    %v915 = vmul.bf16 %v787, %v885
    %v916 = vmul.bf16 %v788, %v887
    %v917 = vmul.bf16 %v789, %v889
    %v918 = vmul.bf16 %v790, %v891
    %v919 = vmul.bf16 %v791, %v893
    %v920 = vmul.bf16 %v792, %v895
    %v921 = vmul.bf16 %v793, %v897
    %v922 = vmul.bf16 %v794, %v899
    %v923 = vmul.bf16 %v795, %v901
    %v924 = vmul.bf16 %v796, %v903
    %v925 = vmul.bf16 %v797, %v905
    %v926 = vmul.bf16 %v798, %v907
    %v927 = vmul.bf16 %v799, %v909
    %v928 = vmul.bf16 %v800, %v911
    %v929 = vmul.bf16 %v801, %v913
    %930 = vmatprep.subr.bf16.mxu0 0
    %931 = vmatpush1.bf16.msra.mxu0 %v914
    %932 = vmatprep.subr.bf16.mxu0 0
    %933 = vmatpush1.bf16.msra.mxu0 %v915
    %934 = vmatprep.subr.bf16.mxu0 0
    %935 = vmatpush1.bf16.msra.mxu0 %v916
    %936 = vmatprep.subr.bf16.mxu0 0
    %937 = vmatpush1.bf16.msra.mxu0 %v917
    %938 = vmatprep.subr.bf16.mxu0 0
    %939 = vmatpush1.bf16.msra.mxu0 %v918
    %940 = vmatprep.subr.bf16.mxu0 0
    %941 = vmatpush1.bf16.msra.mxu0 %v919
    %942 = vmatprep.subr.bf16.mxu0 0
    %943 = vmatpush1.bf16.msra.mxu0 %v920
    %944 = vmatprep.subr.bf16.mxu0 0
    %945 = vmatpush1.bf16.msra.mxu0 %v921
    %946 = vmatprep.subr.bf16.mxu0 0
    %947 = vmatpush1.bf16.msra.mxu0 %v922
    %948 = vmatprep.subr.bf16.mxu0 0
    %949 = vmatpush1.bf16.msra.mxu0 %v923
    %950 = vmatprep.subr.bf16.mxu0 0
    %951 = vmatpush1.bf16.msra.mxu0 %v924
    %952 = vmatprep.subr.bf16.mxu0 0
    %953 = vmatpush1.bf16.msra.mxu0 %v925
    %954 = vmatprep.subr.bf16.mxu0 0
    %955 = vmatpush1.bf16.msra.mxu0 %v926
    %956 = vmatprep.subr.bf16.mxu0 0
    %957 = vmatpush1.bf16.msra.mxu0 %v927
    %958 = vmatprep.subr.bf16.mxu0 0
    %959 = vmatpush1.bf16.msra.mxu0 %v928
    %960 = vmatprep.subr.bf16.mxu0 0
    %961 = vmatpush1.bf16.msra.mxu0 %v929
    %962 = vmatprep.mubr.bf16.mxu0 1065369472
    %963 = vmatmul.mubr.bf16.gmra.mrb[0].mxu0 1065369472
    %v964 = vpop.f32.mrb[0].mxu0
    %v965 = vadd.f32 0.0, %v964
    %v966 = vpop.f32.mrb[0].mxu0
    %v967 = vpop.f32.mrb[0].mxu0
    %v968 = vpop.f32.mrb[0].mxu0
    %969 = vdwg.mxu0
    %970 = vst [vmem:[#allocation2 + $0x1] sm:$0x1] %v965
    %v971 = vld [vmem:[#allocation2] sm:$0x3]
    %v972 = vpack.c.bf16 %v971, %v971
    %v973 = vld [vmem:[#allocation6] sm:$0xf]
    %v974 = vld [vmem:[#allocation6 + $0x4] sm:$0xf]
    %v975 = vld [vmem:[#allocation6 + $0x8] sm:$0xf]
    %v976 = vld [vmem:[#allocation6 + $0xc] sm:$0xf]
    %v977 = vld [vmem:[#allocation6 + $0x10] sm:$0xf]
    %v978 = vld [vmem:[#allocation6 + $0x14] sm:$0xf]
    %v979 = vld [vmem:[#allocation6 + $0x18] sm:$0xf]
    %v980 = vld [vmem:[#allocation6 + $0x1c] sm:$0xf]
    %v981 = vld [vmem:[#allocation6 + $0x20] sm:$0xf]
    %v982 = vld [vmem:[#allocation6 + $0x24] sm:$0xf]
    %v983 = vld [vmem:[#allocation6 + $0x28] sm:$0xf]
    %v984 = vld [vmem:[#allocation6 + $0x2c] sm:$0xf]
    %v985 = vld [vmem:[#allocation6 + $0x30] sm:$0xf]
    %v986 = vld [vmem:[#allocation6 + $0x34] sm:$0xf]
    %v987 = vld [vmem:[#allocation6 + $0x38] sm:$0xf]
    %v988 = vld [vmem:[#allocation6 + $0x3c] sm:$0xf]
    %v989 = vld [vmem:[%s4] sm:$0x1]
    %v991 = vlaneseq
    %v992 = vshrl.u32 %v991, 7
    %v993 = vsub.s32 0, %v992
    %v994 = vrot.slane %v989, %v993
    %v1012 = vunpack.c.l.b16 %v973
    %v1013 = vunpack.c.l.b16 %v974
    %v1014 = vunpack.c.l.b16 %v975
    %v1015 = vunpack.c.l.b16 %v976
    %v1016 = vunpack.c.l.b16 %v977
    %v1017 = vunpack.c.l.b16 %v978
    %v1018 = vunpack.c.l.b16 %v979
    %v1019 = vunpack.c.l.b16 %v980
    %v1020 = vunpack.c.l.b16 %v981
    %v1021 = vunpack.c.l.b16 %v982
    %v1022 = vunpack.c.l.b16 %v983
    %v1023 = vunpack.c.l.b16 %v984
    %v1024 = vunpack.c.l.b16 %v985
    %v1025 = vunpack.c.l.b16 %v986
    %v1026 = vunpack.c.l.b16 %v987
    %v1027 = vunpack.c.l.b16 %v988
    %v1028 = vpack.c.b16 %v1013, %v1012
    %v1029 = vpack.c.b16 %v1015, %v1014
    %v1030 = vpack.c.b16 %v1017, %v1016
    %v1031 = vpack.c.b16 %v1019, %v1018
    %v1032 = vpack.c.b16 %v1021, %v1020
    %v1033 = vpack.c.b16 %v1023, %v1022
    %v1034 = vpack.c.b16 %v1025, %v1024
    %v1035 = vpack.c.b16 %v1027, %v1026
    %1044 = vmatprep.subr.bf16.mxu0 0
    %1045 = vmatpush1.bf16.msra.mxu0 %v1028
    %1046 = vmatprep.subr.bf16.mxu0 0
    %1047 = vmatpush1.bf16.msra.mxu0 %v1029
    %1048 = vmatprep.subr.bf16.mxu0 0
    %1049 = vmatpush1.bf16.msra.mxu0 %v1030
    %1050 = vmatprep.subr.bf16.mxu0 0
    %1051 = vmatpush1.bf16.msra.mxu0 %v1031
    %1052 = vmatprep.subr.bf16.mxu0 0
    %1053 = vmatpush1.bf16.msra.mxu0 %v1032
    %1054 = vmatprep.subr.bf16.mxu0 0
    %1055 = vmatpush1.bf16.msra.mxu0 %v1033
    %1056 = vmatprep.subr.bf16.mxu0 0
    %1057 = vmatpush1.bf16.msra.mxu0 %v1034
    %1058 = vmatprep.subr.bf16.mxu0 0
    %1059 = vmatpush1.bf16.msra.mxu0 %v1035
    %1060 = vmatprep.subr.bf16.mxu0 0
    %1061 = vmatpush1.bf16.msra.mxu0 0
    %1062 = vmatprep.subr.bf16.mxu0 0
    %1063 = vmatpush1.bf16.msra.mxu0 0
    %1064 = vmatprep.subr.bf16.mxu0 0
    %1065 = vmatpush1.bf16.msra.mxu0 0
    %1066 = vmatprep.subr.bf16.mxu0 0
    %1067 = vmatpush1.bf16.msra.mxu0 0
    %1068 = vmatprep.subr.bf16.mxu0 0
    %1069 = vmatpush1.bf16.msra.mxu0 0
    %1070 = vmatprep.subr.bf16.mxu0 0
    %1071 = vmatpush1.bf16.msra.mxu0 0
    %1072 = vmatprep.subr.bf16.mxu0 0
    %1073 = vmatpush1.bf16.msra.mxu0 0
    %1074 = vmatprep.subr.bf16.mxu0 0
    %1075 = vmatpush1.bf16.msra.mxu0 0
    %1076 = vmatprep.mubr.bf16.mxu0 0
    %1077 = vmatmul.mubr.bf16.gmra.mrb[0].mxu0 %v972
    %v1078 = vpop.f32.mrb[0].mxu0
    %v1079 = vadd.f32 %v994, %v1078
    %v1080 = vpop.f32.mrb[0].mxu0
    %v1081 = vpop.f32.mrb[0].mxu0
    %v1082 = vpop.f32.mrb[0].mxu0
    %1083 = vdwg.mxu0
    %v1084 = vpack.c.bf16 %v1079, %v1079
    %v1085 = vxor.u32 %v1084, 2147516416
    %v1087 = vmul.bf16 %v1085, 1069105081
    %v1088 = vpow.bf16.pop %v1087
    %v1089 = vadd.bf16 %v1088, 1065369472
    %v1090 = vrcp.bf16.pop %v1089
    %v1091 = vmul.bf16 1065369472, %v1090
    %v1092 = vmul.bf16 %v1084, %v1091
    %v1093 = vld [vmem:[#allocation8] sm:$0xf]
    %v1094 = vld [vmem:[#allocation8 + $0x4] sm:$0xf]
    %v1095 = vld [vmem:[#allocation8 + $0x8] sm:$0xf]
    %v1096 = vld [vmem:[#allocation8 + $0xc] sm:$0xf]
    %v1097 = vld [vmem:[#allocation8 + $0x10] sm:$0xf]
    %v1098 = vld [vmem:[#allocation8 + $0x14] sm:$0xf]
    %v1099 = vld [vmem:[#allocation8 + $0x18] sm:$0xf]
    %v1100 = vld [vmem:[#allocation8 + $0x1c] sm:$0xf]
    %v1101 = vld [vmem:[#allocation8 + $0x20] sm:$0xf]
    %v1102 = vld [vmem:[#allocation8 + $0x24] sm:$0xf]
    %v1103 = vld [vmem:[#allocation8 + $0x28] sm:$0xf]
    %v1104 = vld [vmem:[#allocation8 + $0x2c] sm:$0xf]
    %v1105 = vld [vmem:[#allocation8 + $0x30] sm:$0xf]
    %v1106 = vld [vmem:[#allocation8 + $0x34] sm:$0xf]
    %v1107 = vld [vmem:[#allocation8 + $0x38] sm:$0xf]
    %v1108 = vld [vmem:[#allocation8 + $0x3c] sm:$0xf]
    %v1109 = vld [vmem:[%s6] sm:$0x1]
    %v1111 = vlaneseq
    %v1112 = vshrl.u32 %v1111, 7
    %v1113 = vsub.s32 0, %v1112
    %v1114 = vrot.slane %v1109, %v1113
    %v1132 = vunpack.c.l.b16 %v1093
    %v1133 = vunpack.c.l.b16 %v1094
    %v1134 = vunpack.c.l.b16 %v1095
    %v1135 = vunpack.c.l.b16 %v1096
    %v1136 = vunpack.c.l.b16 %v1097
    %v1137 = vunpack.c.l.b16 %v1098
    %v1138 = vunpack.c.l.b16 %v1099
    %v1139 = vunpack.c.l.b16 %v1100
    %v1140 = vunpack.c.l.b16 %v1101
    %v1141 = vunpack.c.l.b16 %v1102
    %v1142 = vunpack.c.l.b16 %v1103
    %v1143 = vunpack.c.l.b16 %v1104
    %v1144 = vunpack.c.l.b16 %v1105
    %v1145 = vunpack.c.l.b16 %v1106
    %v1146 = vunpack.c.l.b16 %v1107
    %v1147 = vunpack.c.l.b16 %v1108
    %v1148 = vpack.c.b16 %v1133, %v1132
    %v1149 = vpack.c.b16 %v1135, %v1134
    %v1150 = vpack.c.b16 %v1137, %v1136
    %v1151 = vpack.c.b16 %v1139, %v1138
    %v1152 = vpack.c.b16 %v1141, %v1140
    %v1153 = vpack.c.b16 %v1143, %v1142
    %v1154 = vpack.c.b16 %v1145, %v1144
    %v1155 = vpack.c.b16 %v1147, %v1146
    %1164 = vmatprep.subr.bf16.mxu0 0
    %1165 = vmatpush1.bf16.msra.mxu0 %v1148
    %1166 = vmatprep.subr.bf16.mxu0 0
    %1167 = vmatpush1.bf16.msra.mxu0 %v1149
    %1168 = vmatprep.subr.bf16.mxu0 0
    %1169 = vmatpush1.bf16.msra.mxu0 %v1150
    %1170 = vmatprep.subr.bf16.mxu0 0
    %1171 = vmatpush1.bf16.msra.mxu0 %v1151
    %1172 = vmatprep.subr.bf16.mxu0 0
    %1173 = vmatpush1.bf16.msra.mxu0 %v1152
    %1174 = vmatprep.subr.bf16.mxu0 0
    %1175 = vmatpush1.bf16.msra.mxu0 %v1153
    %1176 = vmatprep.subr.bf16.mxu0 0
    %1177 = vmatpush1.bf16.msra.mxu0 %v1154
    %1178 = vmatprep.subr.bf16.mxu0 0
    %1179 = vmatpush1.bf16.msra.mxu0 %v1155
    %1180 = vmatprep.subr.bf16.mxu0 0
    %1181 = vmatpush1.bf16.msra.mxu0 0
    %1182 = vmatprep.subr.bf16.mxu0 0
    %1183 = vmatpush1.bf16.msra.mxu0 0
    %1184 = vmatprep.subr.bf16.mxu0 0
    %1185 = vmatpush1.bf16.msra.mxu0 0
    %1186 = vmatprep.subr.bf16.mxu0 0
    %1187 = vmatpush1.bf16.msra.mxu0 0
    %1188 = vmatprep.subr.bf16.mxu0 0
    %1189 = vmatpush1.bf16.msra.mxu0 0
    %1190 = vmatprep.subr.bf16.mxu0 0
    %1191 = vmatpush1.bf16.msra.mxu0 0
    %1192 = vmatprep.subr.bf16.mxu0 0
    %1193 = vmatpush1.bf16.msra.mxu0 0
    %1194 = vmatprep.subr.bf16.mxu0 0
    %1195 = vmatpush1.bf16.msra.mxu0 0
    %1196 = vmatprep.mubr.bf16.mxu0 0
    %1197 = vmatmul.mubr.bf16.gmra.mrb[0].mxu0 %v1092
    %v1198 = vpop.f32.mrb[0].mxu0
    %v1199 = vadd.f32 %v1114, %v1198
    %v1200 = vpop.f32.mrb[0].mxu0
    %v1201 = vpop.f32.mrb[0].mxu0
    %v1202 = vpop.f32.mrb[0].mxu0
    %1203 = vdwg.mxu0
    %1204 = vst [vmem:[#allocation9] sm:$0x3] %v1199
    // Predicated region
    $region42: #{tpu_custom_call.1} parent=1 // pred_check
      _
    $region43: #{tpu_custom_call.1} parent=1 // pred_check_branch
      %1206 = sbr.rel (0) target = $region45
    $region44: #{tpu_custom_call.1} parent=1 // pred_region
      %s1208 = ssub.s32 32, 32
      %1209 = vsyncadd [#allocation5], %s1208
      %s1211 = sshll.u32 [#allocation9], 4
      %s1212 = int_to_ptr.vmem [resolvable:$true] %s1211
      %1214 = dma.vmem_to_hbm [thread:$0]  %s1212, 32, %s7, [#allocation5]
    $region45: #{tpu_custom_call.1} parent=1 // pred_fallthru
      _
    // Predicated region
    $region46: #{tpu_custom_call.1} parent=1 // pred_check
      _
    $region47: #{tpu_custom_call.1} parent=1 // pred_check_branch
      %1216 = sbr.rel (0) target = $region49
    $region48: #{tpu_custom_call.1} parent=1 // pred_region
      %1217 = dma.done [#allocation5], 32
    $region49: #{tpu_custom_call.1} parent=1 // pred_fallthru
      _
    %1218 = vsyncpa [#allocation4], 1
    %1219 = vsyncpa [#allocation7], 1
    %1220 = vsyncpa [#allocation5], 1

</llo_original>
